<compile_context>
chip_gen: v6e
topology: v6e:2x2x1
jax: 0.10.0
libtpu: 0.0.40
codegen_flags: <defaults>
</compile_context>

<pallas_src>
import functools
import math

import jax
import jax.numpy as jnp
from jax.experimental import pallas as pl
from jax.experimental.pallas import tpu as pltpu


def _round_up(n, m):
    return ((n + m - 1) // m) * m


def _actor_kernel(x_ref,
                  w1_ref, b1_ref,
                  w2_ref, b2_ref,
                  w3_ref, b3_ref,
                  w4_ref, b4_ref,
                  out_ref,
                  *, compute_dtype):
    """One batch tile: 4 dense layers, ReLU between, dropout == identity."""
    # Cast the input once; h is carried in compute_dtype so each MXU dot
    # needs no additional cast / f32 copy of h.
    h = x_ref[...].astype(compute_dtype)

    def dense_relu(h, w_ref, b_ref):
        # MXU dot in compute_dtype (f32 or bf16) with f32 accumulation;
        # bias-add / ReLU stay in f32 (v5e VPU has no bf16).
        y = jnp.dot(h, w_ref[...], preferred_element_type=jnp.float32)
        y = y + b_ref[...]
        return jnp.maximum(y, 0.0).astype(compute_dtype)

    h = dense_relu(h, w1_ref, b1_ref)   # layer1a + ReLU (+ eval dropout)
    h = dense_relu(h, w2_ref, b2_ref)   # layer2a + ReLU (+ eval dropout)
    h = dense_relu(h, w3_ref, b3_ref)   # layer3a + ReLU (+ eval dropout)

    # outputa (mu head, no activation) -- f32 accumulation, f32 output.
    mu = jnp.dot(h, w4_ref[...], preferred_element_type=jnp.float32) + b4_ref[...]
    out_ref[...] = mu.astype(out_ref.dtype)


def actor_forward(x, params, *, weight_dtype=jnp.float32, batch_tile=512,
                  megacore_min_batch=1024):
    """x: (B, state_dim) f32.  params: (in,out) weights, (1,out) biases.

    Pads features to 128-lane multiples, picks a balanced batch tile, runs a
    batch-gridded fused MLP kernel with VMEM-resident (single-buffered)
    weights, then slices back to (B, act_dim).
    """
    B, S = x.shape
    H = params["w1"].shape[1]
    A = params["w4"].shape[1]

    # Lane-friendly padded feature sizes.
    S_p = _round_up(S, 128)
    H_p = _round_up(H, 128)
    A_p = _round_up(A, 128)

    # Balanced batch tiling (minimizes dead-row padding for awkward B).
    num_tiles = max(1, math.ceil(B / batch_tile))
    if B >= megacore_min_batch and num_tiles == 1:
        # Large batch that fits one tile: split so the parallel grid axis has
        # at least 2 steps for the two v7x TensorCores (neutral on v5e/v6e).
        num_tiles = 2
    TB = _round_up(math.ceil(B / num_tiles), 8)   # sublane multiple
    B_p = num_tiles * TB

    # Small batches are weight-HBM-bandwidth bound: sharding them across the
    # two v7x cores would just double the weight DMA.  Only go parallel when
    # compute is worth splitting.
    use_parallel = (num_tiles >= 2) and (B >= megacore_min_batch)
    dim_sem = ("parallel",) if use_parallel else ("arbitrary",)

    def pad2(a, rows, cols):
        return jnp.pad(a, ((0, rows - a.shape[0]), (0, cols - a.shape[1])))

    # Zero-pad: padded weight rows/cols and bias cols are zero, so padded
    # lanes carry exact zeros through every layer and the final slice is exact.
    x_p = pad2(x, B_p, S_p)
    w1 = pad2(params["w1"], S_p, H_p).astype(weight_dtype)
    w2 = pad2(params["w2"], H_p, H_p).astype(weight_dtype)
    w3 = pad2(params["w3"], H_p, H_p).astype(weight_dtype)
    w4 = pad2(params["w4"], H_p, A_p).astype(weight_dtype)
    b1 = pad2(params["b1"], 1, H_p)
    b2 = pad2(params["b2"], 1, H_p)
    b3 = pad2(params["b3"], 1, H_p)
    b4 = pad2(params["b4"], 1, A_p)

    grid = (num_tiles,)

    # Batch-tiled activation specs (default double-buffered pipelining).
    x_spec = pl.BlockSpec((TB, S_p), lambda i: (i, 0))
    out_spec = pl.BlockSpec((TB, A_p), lambda i: (i, 0))

    # Weights/biases pinned in VMEM across the whole grid: constant index_map
    # + single buffer (no point double-buffering a block that never changes).
    def resident_spec(shape):
        return pl.BlockSpec(shape, lambda i: (0, 0),
                            pipeline_mode=pl.Buffered(1))

    in_specs = [
        x_spec,
        resident_spec((S_p, H_p)), resident_spec((1, H_p)),
        resident_spec((H_p, H_p)), resident_spec((1, H_p)),
        resident_spec((H_p, H_p)), resident_spec((1, H_p)),
        resident_spec((H_p, A_p)), resident_spec((1, A_p)),
    ]

    # --- VMEM budget --------------------------------------------------------
    w_itemsize = jnp.dtype(weight_dtype).itemsize
    weight_elems = S_p * H_p + 2 * H_p * H_p + H_p * A_p
    weight_bytes = weight_elems * w_itemsize                 # single-buffered
    bias_bytes = (3 * H_p + A_p) * 4                         # single-buffered
    act_bytes = 2 * (TB * S_p + TB * A_p) * 4                # 2x-buffered x/out
    # Live intermediates: f32 matmul result + f32 relu temp + compute-dtype h.
    tmp_bytes = TB * H_p * (4 + 4 + w_itemsize)
    vmem_needed = weight_bytes + bias_bytes + act_bytes + tmp_bytes
    vmem_limit = int(vmem_needed * 1.5) + (2 << 20)          # 50% + 2MiB headroom
    vmem_limit = max(vmem_limit, 16 << 20)
    try:
        phys_vmem = int(pltpu.get_tpu_info().vmem_capacity_bytes)
    except Exception:
        phys_vmem = 64 << 20                                  # v7x per-TC floor
    vmem_limit = min(vmem_limit, phys_vmem)

    # Advisory cost estimate so XLA can overlap this call with other work.
    flops = 2 * B_p * (S_p * H_p + 2 * H_p * H_p + H_p * A_p)
    hbm_bytes = (weight_bytes + bias_bytes
                 + (B_p * S_p + B_p * A_p) * 4)
    cost = pl.CostEstimate(flops=flops, transcendentals=0,
                           bytes_accessed=hbm_bytes)

    kernel = functools.partial(_actor_kernel, compute_dtype=weight_dtype)

    out_p = pl.pallas_call(
        kernel,
        out_shape=jax.ShapeDtypeStruct((B_p, A_p), jnp.float32),
        grid_spec=pltpu.PrefetchScalarGridSpec(
            num_scalar_prefetch=0,
            grid=grid,
            in_specs=in_specs,
            out_specs=out_spec,
        ),
        compiler_params=pltpu.CompilerParams(
            dimension_semantics=dim_sem,
            vmem_limit_bytes=vmem_limit,
        ),
        cost_estimate=cost,
    )(x_p, w1, b1, w2, b2, w3, b3, w4, b4)

    return out_p[:B, :A]


def init_actor_params(key, state_dim, act_dim, hidden_dim, init_w=0.003):
    """Deterministic init matching the PyTorch module's uniform ranges.

    Weights are stored transposed: (in_features, out_features).
    """
    ks = jax.random.split(key, 8)

    def lin(kw, kb, fan_in, fan_out, bound):
        w = jax.random.uniform(kw, (fan_in, fan_out), jnp.float32, -bound, bound)
        b = jax.random.uniform(kb, (1, fan_out), jnp.float32, -bound, bound)
        return w, b

    bnd1 = 1.0 / jnp.sqrt(float(state_dim))
    bnd2 = 1.0 / jnp.sqrt(float(hidden_dim))

    w1, b1 = lin(ks[0], ks[1], state_dim, hidden_dim, bnd1)
    w2, b2 = lin(ks[2], ks[3], hidden_dim, hidden_dim, bnd2)
    w3, b3 = lin(ks[4], ks[5], hidden_dim, hidden_dim, bnd2)
    w4, b4 = lin(ks[6], ks[7], hidden_dim, act_dim, init_w)

    return {"w1": w1, "b1": b1,
            "w2": w2, "b2": b2,
            "w3": w3, "b3": b3,
            "w4": w4, "b4": b4}


def actor_forward_ref(x, p):
    """Pure-JAX reference for correctness checking (eval-mode dropout)."""
    h = jax.nn.relu(x @ p["w1"] + p["b1"])
    h = jax.nn.relu(h @ p["w2"] + p["b2"])
    h = jax.nn.relu(h @ p["w3"] + p["b3"])
    return h @ p["w4"] + p["b4"]


if __name__ == "__main__":
    state_dim, act_dim, hidden_dim = 16, 4, 32
    batch = 2

    key = jax.random.PRNGKey(0)
    k_params, k_x = jax.random.split(key)

    params = init_actor_params(k_params, state_dim, act_dim, hidden_dim)
    x = jax.random.normal(k_x, (batch, state_dim), jnp.float32)

    mu_ref = actor_forward_ref(x, params)

    # f32 weights path (exact match to reference), single-tile grid.
    mu = actor_forward(x, params)
    mu = jax.block_until_ready(mu)
    assert mu.shape == (batch, act_dim)
    assert jnp.allclose(mu, mu_ref, atol=1e-5, rtol=1e-5)

    # bf16-weight path (f32 accumulation) -- production config for v6e/v7x.
    mu_bf16 = actor_forward(x, params, weight_dtype=jnp.bfloat16)
    mu_bf16 = jax.block_until_ready(mu_bf16)
    assert mu_bf16.shape == (batch, act_dim)
    assert jnp.allclose(mu_bf16, mu_ref, atol=5e-2, rtol=5e-2)

    # Multi-tile grid with an awkward (non-multiple) batch: exercises the
    # balanced batch tiling + resident-weight (Buffered(1)) path.
    batch2 = 20
    x2 = jax.random.normal(jax.random.PRNGKey(1), (batch2, state_dim), jnp.float32)
    mu2 = actor_forward(x2, params, batch_tile=8)
    mu2 = jax.block_until_ready(mu2)
    assert mu2.shape == (batch2, act_dim)
    assert jnp.allclose(mu2, actor_forward_ref(x2, params), atol=1e-5, rtol=1e-5)

    print("KERNEL_OK")
</pallas_src>

<mosaic_0001>
module attributes {stable_mosaic.version = 11 : i64} {
  func.func @_actor_kernel(%arg0: i32, %arg1: memref<8x128xf32, #tpu.memory_space<vmem>>, %arg2: memref<128x128xf32, #tpu.memory_space<vmem>>, %arg3: memref<1x128xf32, #tpu.memory_space<vmem>>, %arg4: memref<128x128xf32, #tpu.memory_space<vmem>>, %arg5: memref<1x128xf32, #tpu.memory_space<vmem>>, %arg6: memref<128x128xf32, #tpu.memory_space<vmem>>, %arg7: memref<1x128xf32, #tpu.memory_space<vmem>>, %arg8: memref<128x128xf32, #tpu.memory_space<vmem>>, %arg9: memref<1x128xf32, #tpu.memory_space<vmem>>, %arg10: memref<8x128xf32, #tpu.memory_space<vmem>>) attributes {dimension_semantics = [#tpu.dimension_semantics<arbitrary>], iteration_bounds = array<i64: 1>, scalar_prefetch = 0 : i64, scratch_operands = 0 : i64, tpu.core_type = #tpu.core_type<tc>, window_params = [{transform_indices = @transform_0, window_bounds = array<i64: 8, 128>}, {pipeline_mode = #tpu.pipeline_mode<synchronous>, transform_indices = @transform_1, window_bounds = array<i64: 128, 128>}, {pipeline_mode = #tpu.pipeline_mode<synchronous>, transform_indices = @transform_2, window_bounds = array<i64: 1, 128>}, {pipeline_mode = #tpu.pipeline_mode<synchronous>, transform_indices = @transform_3, window_bounds = array<i64: 128, 128>}, {pipeline_mode = #tpu.pipeline_mode<synchronous>, transform_indices = @transform_4, window_bounds = array<i64: 1, 128>}, {pipeline_mode = #tpu.pipeline_mode<synchronous>, transform_indices = @transform_5, window_bounds = array<i64: 128, 128>}, {pipeline_mode = #tpu.pipeline_mode<synchronous>, transform_indices = @transform_6, window_bounds = array<i64: 1, 128>}, {pipeline_mode = #tpu.pipeline_mode<synchronous>, transform_indices = @transform_7, window_bounds = array<i64: 128, 128>}, {pipeline_mode = #tpu.pipeline_mode<synchronous>, transform_indices = @transform_8, window_bounds = array<i64: 1, 128>}, {transform_indices = @transform_9, window_bounds = array<i64: 8, 128>}]} {
    %c0 = arith.constant 0 : index
    %c0_0 = arith.constant 0 : index
    %0 = vector.load %arg1[%c0, %c0_0] : memref<8x128xf32, #tpu.memory_space<vmem>>, vector<8x128xf32>
    %c0_1 = arith.constant 0 : index
    %c0_2 = arith.constant 0 : index
    %1 = vector.load %arg2[%c0_1, %c0_2] : memref<128x128xf32, #tpu.memory_space<vmem>>, vector<128x128xf32>
    %cst = arith.constant dense<0.000000e+00> : vector<8x128xf32>
    %2 = tpu.matmul %0, %1, %cst {dimension_numbers = #tpu.dot_dimension_numbers<[1], [0], [0], [1], [0, 0, 1, 1], [], []>} : vector<8x128xf32>, vector<128x128xf32>, vector<8x128xf32> -> vector<8x128xf32>
    %c0_3 = arith.constant 0 : index
    %c0_4 = arith.constant 0 : index
    %3 = vector.load %arg3[%c0_3, %c0_4] : memref<1x128xf32, #tpu.memory_space<vmem>>, vector<1x128xf32>
    %4 = vector.broadcast %3 : vector<1x128xf32> to vector<8x128xf32>
    %5 = arith.addf %2, %4 : vector<8x128xf32>
    %cst_5 = arith.constant 0.000000e+00 : f32
    %6 = vector.broadcast %cst_5 : f32 to vector<8x128xf32>
    %7 = arith.maximumf %5, %6 : vector<8x128xf32>
    %c0_6 = arith.constant 0 : index
    %c0_7 = arith.constant 0 : index
    %8 = vector.load %arg4[%c0_6, %c0_7] : memref<128x128xf32, #tpu.memory_space<vmem>>, vector<128x128xf32>
    %cst_8 = arith.constant dense<0.000000e+00> : vector<8x128xf32>
    %9 = tpu.matmul %7, %8, %cst_8 {dimension_numbers = #tpu.dot_dimension_numbers<[1], [0], [0], [1], [0, 0, 1, 1], [], []>} : vector<8x128xf32>, vector<128x128xf32>, vector<8x128xf32> -> vector<8x128xf32>
    %c0_9 = arith.constant 0 : index
    %c0_10 = arith.constant 0 : index
    %10 = vector.load %arg5[%c0_9, %c0_10] : memref<1x128xf32, #tpu.memory_space<vmem>>, vector<1x128xf32>
    %11 = vector.broadcast %10 : vector<1x128xf32> to vector<8x128xf32>
    %12 = arith.addf %9, %11 : vector<8x128xf32>
    %cst_11 = arith.constant 0.000000e+00 : f32
    %13 = vector.broadcast %cst_11 : f32 to vector<8x128xf32>
    %14 = arith.maximumf %12, %13 : vector<8x128xf32>
    %c0_12 = arith.constant 0 : index
    %c0_13 = arith.constant 0 : index
    %15 = vector.load %arg6[%c0_12, %c0_13] : memref<128x128xf32, #tpu.memory_space<vmem>>, vector<128x128xf32>
    %cst_14 = arith.constant dense<0.000000e+00> : vector<8x128xf32>
    %16 = tpu.matmul %14, %15, %cst_14 {dimension_numbers = #tpu.dot_dimension_numbers<[1], [0], [0], [1], [0, 0, 1, 1], [], []>} : vector<8x128xf32>, vector<128x128xf32>, vector<8x128xf32> -> vector<8x128xf32>
    %c0_15 = arith.constant 0 : index
    %c0_16 = arith.constant 0 : index
    %17 = vector.load %arg7[%c0_15, %c0_16] : memref<1x128xf32, #tpu.memory_space<vmem>>, vector<1x128xf32>
    %18 = vector.broadcast %17 : vector<1x128xf32> to vector<8x128xf32>
    %19 = arith.addf %16, %18 : vector<8x128xf32>
    %cst_17 = arith.constant 0.000000e+00 : f32
    %20 = vector.broadcast %cst_17 : f32 to vector<8x128xf32>
    %21 = arith.maximumf %19, %20 : vector<8x128xf32>
    %c0_18 = arith.constant 0 : index
    %c0_19 = arith.constant 0 : index
    %22 = vector.load %arg8[%c0_18, %c0_19] : memref<128x128xf32, #tpu.memory_space<vmem>>, vector<128x128xf32>
    %cst_20 = arith.constant dense<0.000000e+00> : vector<8x128xf32>
    %23 = tpu.matmul %21, %22, %cst_20 {dimension_numbers = #tpu.dot_dimension_numbers<[1], [0], [0], [1], [0, 0, 1, 1], [], []>} : vector<8x128xf32>, vector<128x128xf32>, vector<8x128xf32> -> vector<8x128xf32>
    %c0_21 = arith.constant 0 : index
    %c0_22 = arith.constant 0 : index
    %24 = vector.load %arg9[%c0_21, %c0_22] : memref<1x128xf32, #tpu.memory_space<vmem>>, vector<1x128xf32>
    %25 = vector.broadcast %24 : vector<1x128xf32> to vector<8x128xf32>
    %26 = arith.addf %23, %25 : vector<8x128xf32>
    %c0_23 = arith.constant 0 : index
    %c0_24 = arith.constant 0 : index
    %27 = vector.load %arg10[%c0_23, %c0_24] : memref<8x128xf32, #tpu.memory_space<vmem>>, vector<8x128xf32>
    tpu.vector_store %arg10[%c0_23, %c0_24], %26 {strides = array<i32>} : memref<8x128xf32, #tpu.memory_space<vmem>>, vector<8x128xf32>,
    return
  }
  func.func @transform_0(%arg0: i32) -> (i32, i32) {
    %c0_i32 = arith.constant 0 : i32
    %c0_i32_0 = arith.constant 0 : i32
    return %arg0, %c0_i32 : i32, i32
  }
  func.func @transform_1(%arg0: i32) -> (i32, i32) {
    %c0_i32 = arith.constant 0 : i32
    %c0_i32_0 = arith.constant 0 : i32
    %c0_i32_1 = arith.constant 0 : i32
    return %c0_i32, %c0_i32_0 : i32, i32
  }
  func.func @transform_2(%arg0: i32) -> (i32, i32) {
    %c0_i32 = arith.constant 0 : i32
    %c0_i32_0 = arith.constant 0 : i32
    %c0_i32_1 = arith.constant 0 : i32
    return %c0_i32, %c0_i32_0 : i32, i32
  }
  func.func @transform_3(%arg0: i32) -> (i32, i32) {
    %c0_i32 = arith.constant 0 : i32
    %c0_i32_0 = arith.constant 0 : i32
    %c0_i32_1 = arith.constant 0 : i32
    return %c0_i32, %c0_i32_0 : i32, i32
  }
  func.func @transform_4(%arg0: i32) -> (i32, i32) {
    %c0_i32 = arith.constant 0 : i32
    %c0_i32_0 = arith.constant 0 : i32
    %c0_i32_1 = arith.constant 0 : i32
    return %c0_i32, %c0_i32_0 : i32, i32
  }
  func.func @transform_5(%arg0: i32) -> (i32, i32) {
    %c0_i32 = arith.constant 0 : i32
    %c0_i32_0 = arith.constant 0 : i32
    %c0_i32_1 = arith.constant 0 : i32
    return %c0_i32, %c0_i32_0 : i32, i32
  }
  func.func @transform_6(%arg0: i32) -> (i32, i32) {
    %c0_i32 = arith.constant 0 : i32
    %c0_i32_0 = arith.constant 0 : i32
    %c0_i32_1 = arith.constant 0 : i32
    return %c0_i32, %c0_i32_0 : i32, i32
  }
  func.func @transform_7(%arg0: i32) -> (i32, i32) {
    %c0_i32 = arith.constant 0 : i32
    %c0_i32_0 = arith.constant 0 : i32
    %c0_i32_1 = arith.constant 0 : i32
    return %c0_i32, %c0_i32_0 : i32, i32
  }
  func.func @transform_8(%arg0: i32) -> (i32, i32) {
    %c0_i32 = arith.constant 0 : i32
    %c0_i32_0 = arith.constant 0 : i32
    %c0_i32_1 = arith.constant 0 : i32
    return %c0_i32, %c0_i32_0 : i32, i32
  }
  func.func @transform_9(%arg0: i32) -> (i32, i32) {
    %c0_i32 = arith.constant 0 : i32
    %c0_i32_0 = arith.constant 0 : i32
    return %arg0, %c0_i32 : i32, i32
  }
}

</mosaic_0001>

<llo_original>
// kernel: tpu_custom_call.1
$region0: #{tpu_custom_call.1}
  #allocation0 [shape = 'u32[]', space=smem, size = 0x4, offset = 0x4, fixed_abs, tag = 'smem constant byte address 0x4 - core index']
  #allocation1 [shape = 'u32[144,128]{1,0:T(1,128)}', space=vmem, size = 0x12000, scoped, tag = 'internal scratch']
  %s0 = inlined_call_operand.hbm [shape: f32[8,128], index: 0, kind: input, shape index: {}]
  %s1 = inlined_call_operand.hbm [shape: f32[128,128], index: 1, kind: input, shape index: {}]
  %s2 = inlined_call_operand.vmem [shape: f32[1,128], index: 2, kind: input, shape index: {}]
  %s3 = inlined_call_operand.hbm [shape: f32[128,128], index: 3, kind: input, shape index: {}]
  %s4 = inlined_call_operand.vmem [shape: f32[1,128], index: 4, kind: input, shape index: {}]
  %s5 = inlined_call_operand.hbm [shape: f32[128,128], index: 5, kind: input, shape index: {}]
  %s6 = inlined_call_operand.vmem [shape: f32[1,128], index: 6, kind: input, shape index: {}]
  %s7 = inlined_call_operand.hbm [shape: f32[128,128], index: 7, kind: input, shape index: {}]
  %s8 = inlined_call_operand.vmem [shape: f32[1,128], index: 8, kind: input, shape index: {}]
  %s9 = inlined_call_operand.hbm [shape: f32[8,128], index: 9, kind: output, shape index: {}]
  %s10 = sld [smem:[#allocation0]]
  $region66: #{tpu_custom_call.1} parent=0
    _
  %s12 = ssub.s32 1, %s10
  %s13 = scalar_select 0, %s12, %s10
  $region1: #{tpu_custom_call.1} parent=0
    #allocation2 [shape = 'u8[4096]{0}', space=vmem, size = 0x1000, scoped, tag = 'input window, operand 0, single buffered']
    #allocation3 [shape = 's32[1]{0}', space=sflag, size = 0x4, scoped, tag = 'scoped memory for tpu_custom_call.1']
    #allocation4 [shape = 's32[1]{0}', space=sflag, size = 0x4, scoped, tag = 'scoped memory for tpu_custom_call.1']
    #allocation5 [shape = 'u8[65536]{0}', space=vmem, size = 0x10000, scoped, tag = 'input window, operand 1, single buffered']
    #allocation6 [shape = 's32[1]{0}', space=sflag, size = 0x4, scoped, tag = 'scoped memory for tpu_custom_call.1']
    #allocation7 [shape = 'u8[65536]{0}', space=vmem, size = 0x10000, scoped, tag = 'input window, operand 3, single buffered']
    #allocation8 [shape = 'u8[65536]{0}', space=vmem, size = 0x10000, scoped, tag = 'input window, operand 5, single buffered']
    #allocation9 [shape = 's32[1]{0}', space=sflag, size = 0x4, scoped, tag = 'scoped memory for tpu_custom_call.1']
    #allocation10 [shape = 'u8[65536]{0}', space=vmem, size = 0x10000, scoped, tag = 'input window, operand 7, single buffered']
    #allocation11 [shape = 'u8[4096]{0}', space=vmem, size = 0x1000, scoped, tag = 'output window, operand 0, single buffered']
    %14 = vsyncpa [#allocation3], 0
    %15 = vsyncpa [#allocation6], 0
    %16 = vsyncpa [#allocation9], 0
    %17 = vsyncpa [#allocation4], 0
    // Predicated region
    $region2: #{tpu_custom_call.1} parent=1 // pred_check
      _
    $region3: #{tpu_custom_call.1} parent=1 // pred_check_branch
      %19 = sbr.rel (0) target = $region5
    $region4: #{tpu_custom_call.1} parent=1 // pred_region
      %s21 = ssub.s32 128, 128
      %22 = vsyncadd [#allocation3], %s21
      %s24 = sshll.u32 [#allocation2], 4
      %s25 = int_to_ptr.vmem [resolvable:$true] %s24
      %27 = dma.hbm_to_vmem [thread:$0]  %s0, 128, %s25, [#allocation3]
    $region5: #{tpu_custom_call.1} parent=1 // pred_fallthru
      _
    // Predicated region
    $region6: #{tpu_custom_call.1} parent=1 // pred_check
      _
    $region7: #{tpu_custom_call.1} parent=1 // pred_check_branch
      %29 = sbr.rel (0) target = $region9
    $region8: #{tpu_custom_call.1} parent=1 // pred_region
      %s31 = ssub.s32 2048, 2048
      %32 = vsyncadd [#allocation6], %s31
      %s33 = sshll.u32 [#allocation5], 4
      %s34 = int_to_ptr.vmem [resolvable:$true] %s33
      %39 = dma.hbm_to_vmem [thread:$0]  %s1, 2048, %s34, [#allocation6], 128, 128, 8
    $region9: #{tpu_custom_call.1} parent=1 // pred_fallthru
      _
    // Predicated region
    $region10: #{tpu_custom_call.1} parent=1 // pred_check
      _
    $region11: #{tpu_custom_call.1} parent=1 // pred_check_branch
      %41 = sbr.rel (0) target = $region13
    $region12: #{tpu_custom_call.1} parent=1 // pred_region
      _
    $region13: #{tpu_custom_call.1} parent=1 // pred_fallthru
      _
    // Predicated region
    $region14: #{tpu_custom_call.1} parent=1 // pred_check
      _
    $region15: #{tpu_custom_call.1} parent=1 // pred_check_branch
      %43 = sbr.rel (0) target = $region17
    $region16: #{tpu_custom_call.1} parent=1 // pred_region
      %s45 = ssub.s32 2048, 2048
      %46 = vsyncadd [#allocation6], %s45
      %s47 = sshll.u32 [#allocation7], 4
      %s48 = int_to_ptr.vmem [resolvable:$true] %s47
      %53 = dma.hbm_to_vmem [thread:$0]  %s3, 2048, %s48, [#allocation6], 128, 128, 8
    $region17: #{tpu_custom_call.1} parent=1 // pred_fallthru
      _
    // Predicated region
    $region18: #{tpu_custom_call.1} parent=1 // pred_check
      _
    $region19: #{tpu_custom_call.1} parent=1 // pred_check_branch
      %55 = sbr.rel (0) target = $region21
    $region20: #{tpu_custom_call.1} parent=1 // pred_region
      _
    $region21: #{tpu_custom_call.1} parent=1 // pred_fallthru
      _
    // Predicated region
    $region22: #{tpu_custom_call.1} parent=1 // pred_check
      _
    $region23: #{tpu_custom_call.1} parent=1 // pred_check_branch
      %57 = sbr.rel (0) target = $region25
    $region24: #{tpu_custom_call.1} parent=1 // pred_region
      %s59 = ssub.s32 2048, 2048
      %60 = vsyncadd [#allocation9], %s59
      %s61 = sshll.u32 [#allocation8], 4
      %s62 = int_to_ptr.vmem [resolvable:$true] %s61
      %67 = dma.hbm_to_vmem [thread:$0]  %s5, 2048, %s62, [#allocation9], 128, 128, 8
    $region25: #{tpu_custom_call.1} parent=1 // pred_fallthru
      _
    // Predicated region
    $region26: #{tpu_custom_call.1} parent=1 // pred_check
      _
    $region27: #{tpu_custom_call.1} parent=1 // pred_check_branch
      %69 = sbr.rel (0) target = $region29
    $region28: #{tpu_custom_call.1} parent=1 // pred_region
      _
    $region29: #{tpu_custom_call.1} parent=1 // pred_fallthru
      _
    // Predicated region
    $region30: #{tpu_custom_call.1} parent=1 // pred_check
      _
    $region31: #{tpu_custom_call.1} parent=1 // pred_check_branch
      %71 = sbr.rel (0) target = $region33
    $region32: #{tpu_custom_call.1} parent=1 // pred_region
      %s73 = ssub.s32 2048, 2048
      %74 = vsyncadd [#allocation9], %s73
      %s75 = sshll.u32 [#allocation10], 4
      %s76 = int_to_ptr.vmem [resolvable:$true] %s75
      %81 = dma.hbm_to_vmem [thread:$0]  %s7, 2048, %s76, [#allocation9], 128, 128, 8
    $region33: #{tpu_custom_call.1} parent=1 // pred_fallthru
      _
    // Predicated region
    $region34: #{tpu_custom_call.1} parent=1 // pred_check
      _
    $region35: #{tpu_custom_call.1} parent=1 // pred_check_branch
      %83 = sbr.rel (0) target = $region37
    $region36: #{tpu_custom_call.1} parent=1 // pred_region
      _
    $region37: #{tpu_custom_call.1} parent=1 // pred_fallthru
      _
    // Predicated region
    $region38: #{tpu_custom_call.1} parent=1 // pred_check
      _
    $region39: #{tpu_custom_call.1} parent=1 // pred_check_branch
      %85 = sbr.rel (0) target = $region41
    $region40: #{tpu_custom_call.1} parent=1 // pred_region
      %86 = dma.done [#allocation3], 128
    $region41: #{tpu_custom_call.1} parent=1 // pred_fallthru
      _
    // Predicated region
    $region42: #{tpu_custom_call.1} parent=1 // pred_check
      _
    $region43: #{tpu_custom_call.1} parent=1 // pred_check_branch
      %88 = sbr.rel (0) target = $region45
    $region44: #{tpu_custom_call.1} parent=1 // pred_region
      %89 = dma.done [#allocation6], 2048
    $region45: #{tpu_custom_call.1} parent=1 // pred_fallthru
      _
    // Predicated region
    $region46: #{tpu_custom_call.1} parent=1 // pred_check
      _
    $region47: #{tpu_custom_call.1} parent=1 // pred_check_branch
      %91 = sbr.rel (0) target = $region49
    $region48: #{tpu_custom_call.1} parent=1 // pred_region
      %92 = dma.done [#allocation6], 2048
    $region49: #{tpu_custom_call.1} parent=1 // pred_fallthru
      _
    // Predicated region
    $region50: #{tpu_custom_call.1} parent=1 // pred_check
      _
    $region51: #{tpu_custom_call.1} parent=1 // pred_check_branch
      %94 = sbr.rel (0) target = $region53
    $region52: #{tpu_custom_call.1} parent=1 // pred_region
      %95 = dma.done [#allocation9], 2048
    $region53: #{tpu_custom_call.1} parent=1 // pred_fallthru
      _
    // Predicated region
    $region54: #{tpu_custom_call.1} parent=1 // pred_check
      _
    $region55: #{tpu_custom_call.1} parent=1 // pred_check_branch
      %97 = sbr.rel (0) target = $region57
    $region56: #{tpu_custom_call.1} parent=1 // pred_region
      %98 = dma.done [#allocation9], 2048
    $region57: #{tpu_custom_call.1} parent=1 // pred_fallthru
      _
    %v99 = vld [vmem:[#allocation2] sm:$0xff]
    %v100 = vld [vmem:[#allocation5] sm:$0xff]
    %v101 = vld [vmem:[#allocation5 + $0x8] sm:$0xff]
    %v102 = vld [vmem:[#allocation5 + $0x10] sm:$0xff]
    %v103 = vld [vmem:[#allocation5 + $0x18] sm:$0xff]
    %v104 = vld [vmem:[#allocation5 + $0x20] sm:$0xff]
    %v105 = vld [vmem:[#allocation5 + $0x28] sm:$0xff]
    %v106 = vld [vmem:[#allocation5 + $0x30] sm:$0xff]
    %v107 = vld [vmem:[#allocation5 + $0x38] sm:$0xff]
    %v108 = vld [vmem:[#allocation5 + $0x40] sm:$0xff]
    %v109 = vld [vmem:[#allocation5 + $0x48] sm:$0xff]
    %v110 = vld [vmem:[#allocation5 + $0x50] sm:$0xff]
    %v111 = vld [vmem:[#allocation5 + $0x58] sm:$0xff]
    %v112 = vld [vmem:[#allocation5 + $0x60] sm:$0xff]
    %v113 = vld [vmem:[#allocation5 + $0x68] sm:$0xff]
    %v114 = vld [vmem:[#allocation5 + $0x70] sm:$0xff]
    %v115 = vld [vmem:[#allocation5 + $0x78] sm:$0xff]
    %v116 = vld [vmem:[%s2] sm:$0x1]
    %v118 = vlaneseq
    %v119 = vshrl.u32 %v118, 7
    %v120 = vsub.s32 0, %v119
    %v121 = vrot.slane %v116, %v120
    %123 = vmatprep.subr.mxu0 0.0
    %124 = vmatpush1.msra.mxu0 %v115
    %125 = vmatprep.subr.mxu0 0.0
    %126 = vmatpush1.msra.mxu0 %v114
    %127 = vmatprep.subr.mxu0 0.0
    %128 = vmatpush1.msra.mxu0 %v113
    %129 = vmatprep.subr.mxu0 0.0
    %130 = vmatpush1.msra.mxu0 %v112
    %131 = vmatprep.subr.mxu0 0.0
    %132 = vmatpush1.msra.mxu0 %v111
    %133 = vmatprep.subr.mxu0 0.0
    %134 = vmatpush1.msra.mxu0 %v110
    %135 = vmatprep.subr.mxu0 0.0
    %136 = vmatpush1.msra.mxu0 %v109
    %137 = vmatprep.subr.mxu0 0.0
    %138 = vmatpush1.msra.mxu0 %v108
    %139 = vmatprep.subr.mxu0 0.0
    %140 = vmatpush1.msra.mxu0 %v107
    %141 = vmatprep.subr.mxu0 0.0
    %142 = vmatpush1.msra.mxu0 %v106
    %143 = vmatprep.subr.mxu0 0.0
    %144 = vmatpush1.msra.mxu0 %v105
    %145 = vmatprep.subr.mxu0 0.0
    %146 = vmatpush1.msra.mxu0 %v104
    %147 = vmatprep.subr.mxu0 0.0
    %148 = vmatpush1.msra.mxu0 %v103
    %149 = vmatprep.subr.mxu0 0.0
    %150 = vmatpush1.msra.mxu0 %v102
    %151 = vmatprep.subr.mxu0 0.0
    %152 = vmatpush1.msra.mxu0 %v101
    %153 = vmatprep.subr.mxu0 0.0
    %154 = vmatpush1.msra.mxu0 %v100
    %155 = vmatprep.subr.mxu0 0.0
    %156 = vmatpush2.msra.mxu0 0.0
    %157 = vmatprep.subr.mxu0 0.0
    %158 = vmatpush2.msra.mxu0 0.0
    %159 = vmatprep.subr.mxu0 0.0
    %160 = vmatpush2.msra.mxu0 0.0
    %161 = vmatprep.subr.mxu0 0.0
    %162 = vmatpush2.msra.mxu0 0.0
    %163 = vmatprep.subr.mxu0 0.0
    %164 = vmatpush2.msra.mxu0 0.0
    %165 = vmatprep.subr.mxu0 0.0
    %166 = vmatpush2.msra.mxu0 0.0
    %167 = vmatprep.subr.mxu0 0.0
    %168 = vmatpush2.msra.mxu0 0.0
    %169 = vmatprep.subr.mxu0 0.0
    %170 = vmatpush2.msra.mxu0 0.0
    %171 = vmatprep.subr.mxu0 0.0
    %172 = vmatpush2.msra.mxu0 0.0
    %173 = vmatprep.subr.mxu0 0.0
    %174 = vmatpush2.msra.mxu0 0.0
    %175 = vmatprep.subr.mxu0 0.0
    %176 = vmatpush2.msra.mxu0 0.0
    %177 = vmatprep.subr.mxu0 0.0
    %178 = vmatpush2.msra.mxu0 0.0
    %179 = vmatprep.subr.mxu0 0.0
    %180 = vmatpush2.msra.mxu0 0.0
    %181 = vmatprep.subr.mxu0 0.0
    %182 = vmatpush2.msra.mxu0 0.0
    %183 = vmatprep.subr.mxu0 0.0
    %184 = vmatpush2.msra.mxu0 0.0
    %185 = vmatprep.subr.mxu0 0.0
    %186 = vmatpush2.msra.mxu0 0.0
    %187 = vmatprep.mubr.f32.mxu0 0.0
    %188 = vmatmul.mubr.f32.gmra.mxu0 %v99
    %v189 = vpop.f32.mrf.mxu0
    %v190 = vadd.f32 %v121, %v189
    %v191 = vpop.f32.mrf.mxu0
    %192 = vdwg.mxu0
    %v193 = vmax.f32 %v190, 0.0
    %v194 = vld [vmem:[#allocation7] sm:$0xff]
    %v195 = vld [vmem:[#allocation7 + $0x8] sm:$0xff]
    %v196 = vld [vmem:[#allocation7 + $0x10] sm:$0xff]
    %v197 = vld [vmem:[#allocation7 + $0x18] sm:$0xff]
    %v198 = vld [vmem:[#allocation7 + $0x20] sm:$0xff]
    %v199 = vld [vmem:[#allocation7 + $0x28] sm:$0xff]
    %v200 = vld [vmem:[#allocation7 + $0x30] sm:$0xff]
    %v201 = vld [vmem:[#allocation7 + $0x38] sm:$0xff]
    %v202 = vld [vmem:[#allocation7 + $0x40] sm:$0xff]
    %v203 = vld [vmem:[#allocation7 + $0x48] sm:$0xff]
    %v204 = vld [vmem:[#allocation7 + $0x50] sm:$0xff]
    %v205 = vld [vmem:[#allocation7 + $0x58] sm:$0xff]
    %v206 = vld [vmem:[#allocation7 + $0x60] sm:$0xff]
    %v207 = vld [vmem:[#allocation7 + $0x68] sm:$0xff]
    %v208 = vld [vmem:[#allocation7 + $0x70] sm:$0xff]
    %v209 = vld [vmem:[#allocation7 + $0x78] sm:$0xff]
    %v210 = vld [vmem:[%s4] sm:$0x1]
    %v212 = vlaneseq
    %v213 = vshrl.u32 %v212, 7
    %v214 = vsub.s32 0, %v213
    %v215 = vrot.slane %v210, %v214
    %217 = vmatprep.subr.mxu0 0.0
    %218 = vmatpush1.msra.mxu0 %v209
    %219 = vmatprep.subr.mxu0 0.0
    %220 = vmatpush1.msra.mxu0 %v208
    %221 = vmatprep.subr.mxu0 0.0
    %222 = vmatpush1.msra.mxu0 %v207
    %223 = vmatprep.subr.mxu0 0.0
    %224 = vmatpush1.msra.mxu0 %v206
    %225 = vmatprep.subr.mxu0 0.0
    %226 = vmatpush1.msra.mxu0 %v205
    %227 = vmatprep.subr.mxu0 0.0
    %228 = vmatpush1.msra.mxu0 %v204
    %229 = vmatprep.subr.mxu0 0.0
    %230 = vmatpush1.msra.mxu0 %v203
    %231 = vmatprep.subr.mxu0 0.0
    %232 = vmatpush1.msra.mxu0 %v202
    %233 = vmatprep.subr.mxu0 0.0
    %234 = vmatpush1.msra.mxu0 %v201
    %235 = vmatprep.subr.mxu0 0.0
    %236 = vmatpush1.msra.mxu0 %v200
    %237 = vmatprep.subr.mxu0 0.0
    %238 = vmatpush1.msra.mxu0 %v199
    %239 = vmatprep.subr.mxu0 0.0
    %240 = vmatpush1.msra.mxu0 %v198
    %241 = vmatprep.subr.mxu0 0.0
    %242 = vmatpush1.msra.mxu0 %v197
    %243 = vmatprep.subr.mxu0 0.0
    %244 = vmatpush1.msra.mxu0 %v196
    %245 = vmatprep.subr.mxu0 0.0
    %246 = vmatpush1.msra.mxu0 %v195
    %247 = vmatprep.subr.mxu0 0.0
    %248 = vmatpush1.msra.mxu0 %v194
    %249 = vmatprep.subr.mxu0 0.0
    %250 = vmatpush2.msra.mxu0 0.0
    %251 = vmatprep.subr.mxu0 0.0
    %252 = vmatpush2.msra.mxu0 0.0
    %253 = vmatprep.subr.mxu0 0.0
    %254 = vmatpush2.msra.mxu0 0.0
    %255 = vmatprep.subr.mxu0 0.0
    %256 = vmatpush2.msra.mxu0 0.0
    %257 = vmatprep.subr.mxu0 0.0
    %258 = vmatpush2.msra.mxu0 0.0
    %259 = vmatprep.subr.mxu0 0.0
    %260 = vmatpush2.msra.mxu0 0.0
    %261 = vmatprep.subr.mxu0 0.0
    %262 = vmatpush2.msra.mxu0 0.0
    %263 = vmatprep.subr.mxu0 0.0
    %264 = vmatpush2.msra.mxu0 0.0
    %265 = vmatprep.subr.mxu0 0.0
    %266 = vmatpush2.msra.mxu0 0.0
    %267 = vmatprep.subr.mxu0 0.0
    %268 = vmatpush2.msra.mxu0 0.0
    %269 = vmatprep.subr.mxu0 0.0
    %270 = vmatpush2.msra.mxu0 0.0
    %271 = vmatprep.subr.mxu0 0.0
    %272 = vmatpush2.msra.mxu0 0.0
    %273 = vmatprep.subr.mxu0 0.0
    %274 = vmatpush2.msra.mxu0 0.0
    %275 = vmatprep.subr.mxu0 0.0
    %276 = vmatpush2.msra.mxu0 0.0
    %277 = vmatprep.subr.mxu0 0.0
    %278 = vmatpush2.msra.mxu0 0.0
    %279 = vmatprep.subr.mxu0 0.0
    %280 = vmatpush2.msra.mxu0 0.0
    %281 = vmatprep.mubr.f32.mxu0 0.0
    %282 = vmatmul.mubr.f32.gmra.mxu0 %v193
    %v283 = vpop.f32.mrf.mxu0
    %v284 = vadd.f32 %v215, %v283
    %v285 = vpop.f32.mrf.mxu0
    %286 = vdwg.mxu0
    %v287 = vmax.f32 %v284, 0.0
    %v288 = vld [vmem:[#allocation8] sm:$0xff]
    %v289 = vld [vmem:[#allocation8 + $0x8] sm:$0xff]
    %v290 = vld [vmem:[#allocation8 + $0x10] sm:$0xff]
    %v291 = vld [vmem:[#allocation8 + $0x18] sm:$0xff]
    %v292 = vld [vmem:[#allocation8 + $0x20] sm:$0xff]
    %v293 = vld [vmem:[#allocation8 + $0x28] sm:$0xff]
    %v294 = vld [vmem:[#allocation8 + $0x30] sm:$0xff]
    %v295 = vld [vmem:[#allocation8 + $0x38] sm:$0xff]
    %v296 = vld [vmem:[#allocation8 + $0x40] sm:$0xff]
    %v297 = vld [vmem:[#allocation8 + $0x48] sm:$0xff]
    %v298 = vld [vmem:[#allocation8 + $0x50] sm:$0xff]
    %v299 = vld [vmem:[#allocation8 + $0x58] sm:$0xff]
    %v300 = vld [vmem:[#allocation8 + $0x60] sm:$0xff]
    %v301 = vld [vmem:[#allocation8 + $0x68] sm:$0xff]
    %v302 = vld [vmem:[#allocation8 + $0x70] sm:$0xff]
    %v303 = vld [vmem:[#allocation8 + $0x78] sm:$0xff]
    %v304 = vld [vmem:[%s6] sm:$0x1]
    %v306 = vlaneseq
    %v307 = vshrl.u32 %v306, 7
    %v308 = vsub.s32 0, %v307
    %v309 = vrot.slane %v304, %v308
    %311 = vmatprep.subr.mxu0 0.0
    %312 = vmatpush1.msra.mxu0 %v303
    %313 = vmatprep.subr.mxu0 0.0
    %314 = vmatpush1.msra.mxu0 %v302
    %315 = vmatprep.subr.mxu0 0.0
    %316 = vmatpush1.msra.mxu0 %v301
    %317 = vmatprep.subr.mxu0 0.0
    %318 = vmatpush1.msra.mxu0 %v300
    %319 = vmatprep.subr.mxu0 0.0
    %320 = vmatpush1.msra.mxu0 %v299
    %321 = vmatprep.subr.mxu0 0.0
    %322 = vmatpush1.msra.mxu0 %v298
    %323 = vmatprep.subr.mxu0 0.0
    %324 = vmatpush1.msra.mxu0 %v297
    %325 = vmatprep.subr.mxu0 0.0
    %326 = vmatpush1.msra.mxu0 %v296
    %327 = vmatprep.subr.mxu0 0.0
    %328 = vmatpush1.msra.mxu0 %v295
    %329 = vmatprep.subr.mxu0 0.0
    %330 = vmatpush1.msra.mxu0 %v294
    %331 = vmatprep.subr.mxu0 0.0
    %332 = vmatpush1.msra.mxu0 %v293
    %333 = vmatprep.subr.mxu0 0.0
    %334 = vmatpush1.msra.mxu0 %v292
    %335 = vmatprep.subr.mxu0 0.0
    %336 = vmatpush1.msra.mxu0 %v291
    %337 = vmatprep.subr.mxu0 0.0
    %338 = vmatpush1.msra.mxu0 %v290
    %339 = vmatprep.subr.mxu0 0.0
    %340 = vmatpush1.msra.mxu0 %v289
    %341 = vmatprep.subr.mxu0 0.0
    %342 = vmatpush1.msra.mxu0 %v288
    %343 = vmatprep.subr.mxu0 0.0
    %344 = vmatpush2.msra.mxu0 0.0
    %345 = vmatprep.subr.mxu0 0.0
    %346 = vmatpush2.msra.mxu0 0.0
    %347 = vmatprep.subr.mxu0 0.0
    %348 = vmatpush2.msra.mxu0 0.0
    %349 = vmatprep.subr.mxu0 0.0
    %350 = vmatpush2.msra.mxu0 0.0
    %351 = vmatprep.subr.mxu0 0.0
    %352 = vmatpush2.msra.mxu0 0.0
    %353 = vmatprep.subr.mxu0 0.0
    %354 = vmatpush2.msra.mxu0 0.0
    %355 = vmatprep.subr.mxu0 0.0
    %356 = vmatpush2.msra.mxu0 0.0
    %357 = vmatprep.subr.mxu0 0.0
    %358 = vmatpush2.msra.mxu0 0.0
    %359 = vmatprep.subr.mxu0 0.0
    %360 = vmatpush2.msra.mxu0 0.0
    %361 = vmatprep.subr.mxu0 0.0
    %362 = vmatpush2.msra.mxu0 0.0
    %363 = vmatprep.subr.mxu0 0.0
    %364 = vmatpush2.msra.mxu0 0.0
    %365 = vmatprep.subr.mxu0 0.0
    %366 = vmatpush2.msra.mxu0 0.0
    %367 = vmatprep.subr.mxu0 0.0
    %368 = vmatpush2.msra.mxu0 0.0
    %369 = vmatprep.subr.mxu0 0.0
    %370 = vmatpush2.msra.mxu0 0.0
    %371 = vmatprep.subr.mxu0 0.0
    %372 = vmatpush2.msra.mxu0 0.0
    %373 = vmatprep.subr.mxu0 0.0
    %374 = vmatpush2.msra.mxu0 0.0
    %375 = vmatprep.mubr.f32.mxu0 0.0
    %376 = vmatmul.mubr.f32.gmra.mxu0 %v287
    %v377 = vpop.f32.mrf.mxu0
    %v378 = vadd.f32 %v309, %v377
    %v379 = vpop.f32.mrf.mxu0
    %380 = vdwg.mxu0
    %v381 = vmax.f32 %v378, 0.0
    %v382 = vld [vmem:[#allocation10] sm:$0xff]
    %v383 = vld [vmem:[#allocation10 + $0x8] sm:$0xff]
    %v384 = vld [vmem:[#allocation10 + $0x10] sm:$0xff]
    %v385 = vld [vmem:[#allocation10 + $0x18] sm:$0xff]
    %v386 = vld [vmem:[#allocation10 + $0x20] sm:$0xff]
    %v387 = vld [vmem:[#allocation10 + $0x28] sm:$0xff]
    %v388 = vld [vmem:[#allocation10 + $0x30] sm:$0xff]
    %v389 = vld [vmem:[#allocation10 + $0x38] sm:$0xff]
    %v390 = vld [vmem:[#allocation10 + $0x40] sm:$0xff]
    %v391 = vld [vmem:[#allocation10 + $0x48] sm:$0xff]
    %v392 = vld [vmem:[#allocation10 + $0x50] sm:$0xff]
    %v393 = vld [vmem:[#allocation10 + $0x58] sm:$0xff]
    %v394 = vld [vmem:[#allocation10 + $0x60] sm:$0xff]
    %v395 = vld [vmem:[#allocation10 + $0x68] sm:$0xff]
    %v396 = vld [vmem:[#allocation10 + $0x70] sm:$0xff]
    %v397 = vld [vmem:[#allocation10 + $0x78] sm:$0xff]
    %v398 = vld [vmem:[%s8] sm:$0x1]
    %v400 = vlaneseq
    %v401 = vshrl.u32 %v400, 7
    %v402 = vsub.s32 0, %v401
    %v403 = vrot.slane %v398, %v402
    %405 = vmatprep.subr.mxu0 0.0
    %406 = vmatpush1.msra.mxu0 %v397
    %407 = vmatprep.subr.mxu0 0.0
    %408 = vmatpush1.msra.mxu0 %v396
    %409 = vmatprep.subr.mxu0 0.0
    %410 = vmatpush1.msra.mxu0 %v395
    %411 = vmatprep.subr.mxu0 0.0
    %412 = vmatpush1.msra.mxu0 %v394
    %413 = vmatprep.subr.mxu0 0.0
    %414 = vmatpush1.msra.mxu0 %v393
    %415 = vmatprep.subr.mxu0 0.0
    %416 = vmatpush1.msra.mxu0 %v392
    %417 = vmatprep.subr.mxu0 0.0
    %418 = vmatpush1.msra.mxu0 %v391
    %419 = vmatprep.subr.mxu0 0.0
    %420 = vmatpush1.msra.mxu0 %v390
    %421 = vmatprep.subr.mxu0 0.0
    %422 = vmatpush1.msra.mxu0 %v389
    %423 = vmatprep.subr.mxu0 0.0
    %424 = vmatpush1.msra.mxu0 %v388
    %425 = vmatprep.subr.mxu0 0.0
    %426 = vmatpush1.msra.mxu0 %v387
    %427 = vmatprep.subr.mxu0 0.0
    %428 = vmatpush1.msra.mxu0 %v386
    %429 = vmatprep.subr.mxu0 0.0
    %430 = vmatpush1.msra.mxu0 %v385
    %431 = vmatprep.subr.mxu0 0.0
    %432 = vmatpush1.msra.mxu0 %v384
    %433 = vmatprep.subr.mxu0 0.0
    %434 = vmatpush1.msra.mxu0 %v383
    %435 = vmatprep.subr.mxu0 0.0
    %436 = vmatpush1.msra.mxu0 %v382
    %437 = vmatprep.subr.mxu0 0.0
    %438 = vmatpush2.msra.mxu0 0.0
    %439 = vmatprep.subr.mxu0 0.0
    %440 = vmatpush2.msra.mxu0 0.0
    %441 = vmatprep.subr.mxu0 0.0
    %442 = vmatpush2.msra.mxu0 0.0
    %443 = vmatprep.subr.mxu0 0.0
    %444 = vmatpush2.msra.mxu0 0.0
    %445 = vmatprep.subr.mxu0 0.0
    %446 = vmatpush2.msra.mxu0 0.0
    %447 = vmatprep.subr.mxu0 0.0
    %448 = vmatpush2.msra.mxu0 0.0
    %449 = vmatprep.subr.mxu0 0.0
    %450 = vmatpush2.msra.mxu0 0.0
    %451 = vmatprep.subr.mxu0 0.0
    %452 = vmatpush2.msra.mxu0 0.0
    %453 = vmatprep.subr.mxu0 0.0
    %454 = vmatpush2.msra.mxu0 0.0
    %455 = vmatprep.subr.mxu0 0.0
    %456 = vmatpush2.msra.mxu0 0.0
    %457 = vmatprep.subr.mxu0 0.0
    %458 = vmatpush2.msra.mxu0 0.0
    %459 = vmatprep.subr.mxu0 0.0
    %460 = vmatpush2.msra.mxu0 0.0
    %461 = vmatprep.subr.mxu0 0.0
    %462 = vmatpush2.msra.mxu0 0.0
    %463 = vmatprep.subr.mxu0 0.0
    %464 = vmatpush2.msra.mxu0 0.0
    %465 = vmatprep.subr.mxu0 0.0
    %466 = vmatpush2.msra.mxu0 0.0
    %467 = vmatprep.subr.mxu0 0.0
    %468 = vmatpush2.msra.mxu0 0.0
    %469 = vmatprep.mubr.f32.mxu0 0.0
    %470 = vmatmul.mubr.f32.gmra.mxu0 %v381
    %v471 = vpop.f32.mrf.mxu0
    %v472 = vadd.f32 %v403, %v471
    %v473 = vpop.f32.mrf.mxu0
    %474 = vdwg.mxu0
    %475 = vst [vmem:[#allocation11] sm:$0xff] %v472
    // Predicated region
    $region58: #{tpu_custom_call.1} parent=1 // pred_check
      _
    $region59: #{tpu_custom_call.1} parent=1 // pred_check_branch
      %477 = sbr.rel (0) target = $region61
    $region60: #{tpu_custom_call.1} parent=1 // pred_region
      %s479 = ssub.s32 128, 128
      %480 = vsyncadd [#allocation4], %s479
      %s482 = sshll.u32 [#allocation11], 4
      %s483 = int_to_ptr.vmem [resolvable:$true] %s482
      %485 = dma.vmem_to_hbm [thread:$0]  %s483, 128, %s9, [#allocation4]
    $region61: #{tpu_custom_call.1} parent=1 // pred_fallthru
      _
    // Predicated region
    $region62: #{tpu_custom_call.1} parent=1 // pred_check
      _
    $region63: #{tpu_custom_call.1} parent=1 // pred_check_branch
      %487 = sbr.rel (0) target = $region65
    $region64: #{tpu_custom_call.1} parent=1 // pred_region
      %488 = dma.done [#allocation4], 128
    $region65: #{tpu_custom_call.1} parent=1 // pred_fallthru
      _
    %489 = vsyncpa [#allocation3], 1
    %490 = vsyncpa [#allocation6], 1
    %491 = vsyncpa [#allocation9], 1
    %492 = vsyncpa [#allocation4], 1

</llo_original>
